<compile_context>
chip_gen: v6e
topology: v6e:2x2x1
jax: 0.10.0
libtpu: 0.0.40
codegen_flags: <defaults>
</compile_context>

<pallas_src>
import functools

import jax
import jax.numpy as jnp
from jax.experimental import pallas as pl
from jax.experimental.pallas import tpu as pltpu


def _queue_lse_kernel(q_ref, queue_ref, lse_ref, m_sc, s_sc, *,
                      inv_temperature, static_max):
    """One grid step: fold one queue K-tile into an online logsumexp.

    Grid = (n_split, steps).  The logsumexp state (m, s) is carried in f32 VMEM
    scratch across the inner ("arbitrary") axis; one (N, 1) lse is written per
    split.  `static_max` (Python float or None) is a compile-time upper bound
    on any negative logit (1/T when inputs are L2-normalized); when given, the
    per-tile lane max and the serial rescale chain are skipped.
    """
    j = pl.program_id(1)

    @pl.when(j == 0)
    def _init():
        init_m = -jnp.inf if static_max is None else static_max
        m_sc[...] = jnp.full_like(m_sc, init_m)
        s_sc[...] = jnp.zeros_like(s_sc)

    # Negative logits for this queue tile: native-dtype (bf16) operands on the
    # MXU, f32 accumulation.  inv_temperature is a baked-in Python float.
    neg = jnp.dot(q_ref[...], queue_ref[...],
                  preferred_element_type=jnp.float32) * inv_temperature  # (N, tk)

    if static_max is None:
        m_old = m_sc[...]
        m_new = jnp.maximum(m_old, neg.max(axis=1, keepdims=True))
        s_sc[...] = (s_sc[...] * jnp.exp(m_old - m_new)
                     + jnp.sum(jnp.exp(neg - m_new), axis=1, keepdims=True))
        m_sc[...] = m_new
    else:
        # Normalized inputs: logits <= static_max statically, so a plain sum of
        # exp(logit - bound) suffices (no XLU max, no serial m dependence).
        s_sc[...] = s_sc[...] + jnp.sum(jnp.exp(neg - static_max),
                                        axis=1, keepdims=True)

    @pl.when(j == pl.num_programs(1) - 1)
    def _finalize():
        lse_ref[0] = m_sc[...] + jnp.log(s_sc[...])


def _vmem_capacity_bytes():
    """Physical VMEM of the current TPU generation (conservative fallback)."""
    try:
        info = pltpu.get_tpu_info()
        cap = getattr(info, "vmem_capacity_bytes", None)
        if cap:
            return int(cap)
    except Exception:
        pass
    return 64 << 20  # v7x per-TensorCore VMEM (safest assumption)


def _choose_tile_k(K, C, N, queue_itemsize, tile_cap_bytes, budget_bytes):
    """Pick the queue K-tile width.

    Largest 128-multiple divisor of K such that
      (a) one queue tile stays under tile_cap_bytes, and
      (b) the tk-scaled VMEM (double-buffered queue tile + f32 (N, tk)
          logits/exp intermediates) stays under budget_bytes,
    preferring an even tile count so the leading "parallel" grid axis can be 2
    (v7x megacore; one extra cheap step elsewhere).
    """
    if K % 128 != 0:
        # TODO(synk): non-lane-aligned K falls back to a single untiled block;
        # for very large unaligned K this can exceed VMEM.
        return K
    per_k = 2 * C * queue_itemsize + 2 * N * 4
    cap = min(budget_bytes // per_k, tile_cap_bytes // (C * queue_itemsize))
    cap = max(128, (cap // 128) * 128)
    cap = min(cap, K)
    best_any = 128
    best_even = None
    t = 128
    while t <= cap:
        if K % t == 0:
            best_any = t
            if (K // t) % 2 == 0:
                best_even = t
        t += 128
    return best_even if best_even is not None else best_any


def moco_loss_pallas(q, k, queue, *, temperature, scale_loss,
                     compute_dtype=jnp.bfloat16, assume_normalized=False,
                     tk=None, n_split=None):
    """q, k: (N, C); queue: (C, K). Returns scalar f32 loss for one MoCo stage."""
    N, C = q.shape
    Cq, K = queue.shape
    assert Cq == C

    # HBM-bound stream -> narrow operands (bf16 by default), f32 accumulation.
    q_c = q.astype(compute_dtype)
    queue_c = queue.astype(compute_dtype)
    c_itemsize = jnp.dtype(compute_dtype).itemsize

    # Generation-aware VMEM budget: ~96 MiB of v5e/v6e's 128 MiB physical VMEM
    # with <=16 MiB queue tiles; ~48 MiB of v7x's 64 MiB with <=8 MiB tiles.
    vmem_cap = _vmem_capacity_bytes()
    if vmem_cap > (64 << 20):
        vmem_target, tile_cap = 96 << 20, 16 << 20
    else:
        vmem_target, tile_cap = 48 << 20, 8 << 20

    q_bytes = N * C * c_itemsize
    # Resident q (double-buffered), m/s scratch, headroom for compiler scratch.
    fixed = 2 * q_bytes + 2 * N * 4 + (4 << 20)
    budget = max(vmem_target - fixed, 8 << 20)

    if tk is None:
        tk = _choose_tile_k(K, C, N, c_itemsize, tile_cap, budget)
    assert K % tk == 0, "queue_size must be divisible by the K tile"
    num_tiles = K // tk

    if n_split is None:
        # Leading "parallel" axis: v7x's two TensorCores each stream half of
        # the queue; on single-TC chips it only partitions the loop.
        n_split = 2 if (num_tiles >= 2 and num_tiles % 2 == 0) else 1
    assert num_tiles % n_split == 0
    steps = num_tiles // n_split

    inv_t = float(1.0 / temperature)
    kernel = functools.partial(
        _queue_lse_kernel,
        inv_temperature=inv_t,                      # Python float constant
        # L2-normalized q / queue columns => every negative logit <= 1/T.
        static_max=inv_t if assume_normalized else None,
    )

    # VMEM actually needed: double-buffered queue tile + (N, tk) f32 neg/exp
    # intermediates + resident q + scratch/outputs + headroom (all in `fixed`).
    queue_tile_bytes = C * tk * c_itemsize
    needed = 2 * queue_tile_bytes + 2 * N * tk * 4 + fixed + n_split * N * 8
    vmem_limit = int(min(vmem_target, max(needed, 16 << 20)))

    lse_neg = pl.pallas_call(
        kernel,
        out_shape=jax.ShapeDtypeStruct((n_split, N, 1), jnp.float32),
        grid_spec=pltpu.PrefetchScalarGridSpec(
            num_scalar_prefetch=0,
            grid=(n_split, steps),
            in_specs=[
                pl.BlockSpec((N, C), lambda p, j: (0, 0)),               # q (resident)
                pl.BlockSpec((C, tk), lambda p, j: (0, p * steps + j)),  # queue tile
            ],
            out_specs=pl.BlockSpec((1, N, 1), lambda p, j: (p, 0, 0)),
            scratch_shapes=[
                pltpu.VMEM((N, 1), jnp.float32),  # running max  m
                pltpu.VMEM((N, 1), jnp.float32),  # running sum  s
            ],
        ),
        compiler_params=pltpu.CompilerParams(
            dimension_semantics=("parallel", "arbitrary"),
            vmem_limit_bytes=vmem_limit,
        ),
    )(q_c, queue_c)

    # Tiny JAX epilogue: positive logit in full f32 (matches the PyTorch path),
    # merge per-split negative-logit logsumexps, CE with label 0, mean, scale.
    l_pos = jnp.sum(q.astype(jnp.float32) * k.astype(jnp.float32),
                    axis=1) * inv_t                                 # (N,)
    all_lse = jnp.concatenate([l_pos[None, :], lse_neg[..., 0]], axis=0)
    lse = jax.nn.logsumexp(all_lse, axis=0)                         # (N,)
    return scale_loss * jnp.mean(lse - l_pos)


def dequeue_and_enqueue(queue, queue_ptr, keys, queue_size):
    """Plain-JAX glue reproducing _dequeue_and_euqueue_stage (single device)."""
    batch_size = keys.shape[0]
    new_queue = jax.lax.dynamic_update_slice(queue, keys.T, (0, queue_ptr))
    new_ptr = (queue_ptr + batch_size) % queue_size
    return new_queue, new_ptr


def _reference_loss_f32(q, k, queue, temperature, scale_loss):
    """Pure-JAX f32 reference of the PyTorch forward."""
    l_pos = jnp.sum(q * k, axis=1, keepdims=True)
    l_neg = q @ queue
    logits = jnp.concatenate([l_pos, l_neg], axis=1) / temperature
    lse = jax.nn.logsumexp(logits.astype(jnp.float32), axis=1)
    return scale_loss * jnp.mean(lse - logits[:, 0].astype(jnp.float32))


def _reference_loss_matched(q, k, queue, temperature, scale_loss, compute_dtype):
    """Reference with the same operand narrowing as the kernel
    (l_neg in compute_dtype with f32 accumulation; l_pos in f32)."""
    l_pos = jnp.sum(q.astype(jnp.float32) * k.astype(jnp.float32), axis=1)
    l_neg = jnp.dot(q.astype(compute_dtype), queue.astype(compute_dtype),
                    preferred_element_type=jnp.float32)
    logits = jnp.concatenate([l_pos[:, None], l_neg], axis=1) / temperature
    lse = jax.nn.logsumexp(logits, axis=1)
    return scale_loss * jnp.mean(lse - logits[:, 0])


if __name__ == "__main__":
    # Hyperparameters implied by MoCoLoss.__init__
    embedding_dim = 32
    queue_size = 256
    temperature = 0.07
    scale_loss = 0.5
    batch = 8

    key = jax.random.PRNGKey(0)
    kq, kk, kqueue = jax.random.split(key, 3)

    # Encoder outputs (MoCo normally L2-normalizes them; do the same here).
    q = jax.random.normal(kq, (batch, embedding_dim), dtype=jnp.float32)
    k = jax.random.normal(kk, (batch, embedding_dim), dtype=jnp.float32)
    q = q / jnp.linalg.norm(q, axis=1, keepdims=True)
    k = k / jnp.linalg.norm(k, axis=1, keepdims=True)

    # Queue buffer: randn(C, K), normalized along dim=0 (as in __init__).
    queue = jax.random.normal(kqueue, (embedding_dim, queue_size),
                              dtype=jnp.float32)
    queue = queue / jnp.linalg.norm(queue, axis=0, keepdims=True)
    queue_ptr = jnp.int32(0)

    ref_f32 = _reference_loss_f32(q, k, queue, temperature, scale_loss)
    ref_bf16 = _reference_loss_matched(q, k, queue, temperature, scale_loss,
                                       jnp.bfloat16)

    # Default path: bf16 stream, auto tile, auto split (-> tk=128, n_split=2
    # at this shape, exercising the megacore-style parallel axis).
    loss = moco_loss_pallas(q, k, queue,
                            temperature=temperature, scale_loss=scale_loss)
    loss = jax.block_until_ready(loss)
    assert jnp.allclose(loss, ref_bf16, rtol=2e-3, atol=2e-3), (loss, ref_bf16)
    assert jnp.allclose(loss, ref_f32, rtol=0.0, atol=5e-2), (loss, ref_f32)

    # Sequential multi-tile online-logsumexp carry (single split).
    loss_seq = moco_loss_pallas(q, k, queue, temperature=temperature,
                                scale_loss=scale_loss, tk=128, n_split=1)
    loss_seq = jax.block_until_ready(loss_seq)
    assert jnp.allclose(loss_seq, ref_bf16, rtol=2e-3, atol=2e-3), (loss_seq,
                                                                    ref_bf16)

    # Normalized-input fast path (static logit bound, no online max).
    loss_nrm = moco_loss_pallas(q, k, queue, temperature=temperature,
                                scale_loss=scale_loss, assume_normalized=True)
    loss_nrm = jax.block_until_ready(loss_nrm)
    assert jnp.allclose(loss_nrm, ref_bf16, rtol=2e-3, atol=2e-3), (loss_nrm,
                                                                    ref_bf16)

    # Full f32 operand path (validates compute_dtype plumbing).
    loss_f32 = moco_loss_pallas(q, k, queue, temperature=temperature,
                                scale_loss=scale_loss,
                                compute_dtype=jnp.float32)
    loss_f32 = jax.block_until_ready(loss_f32)
    assert jnp.allclose(loss_f32, ref_f32, rtol=0.0, atol=5e-2), (loss_f32,
                                                                  ref_f32)

    # Side-effect buffer update (no all-gather: single device).
    queue, queue_ptr = dequeue_and_enqueue(queue, queue_ptr, k, queue_size)
    jax.block_until_ready(queue)

    print("KERNEL_OK")
</pallas_src>

<mosaic_0001>
module attributes {stable_mosaic.version = 11 : i64} {
  func.func @_queue_lse_kernel(%arg0: i32, %arg1: i32, %arg2: memref<8x32xbf16, #tpu.memory_space<vmem>>, %arg3: memref<32x128xbf16, #tpu.memory_space<vmem>>, %arg4: memref<1x8x1xf32, #tpu.memory_space<vmem>>, %arg5: memref<8x1xf32, #tpu.memory_space<vmem>>, %arg6: memref<8x1xf32, #tpu.memory_space<vmem>>) attributes {dimension_semantics = [#tpu.dimension_semantics<parallel>, #tpu.dimension_semantics<arbitrary>], iteration_bounds = array<i64: 2, 1>, scalar_prefetch = 0 : i64, scratch_operands = 2 : i64, tpu.core_type = #tpu.core_type<tc>, window_params = [{pipeline_mode = #tpu.pipeline_mode<synchronous>, transform_indices = @transform_0, window_bounds = array<i64: 8, 32>}, {transform_indices = @transform_1, window_bounds = array<i64: 32, 128>}, {transform_indices = @transform_2, window_bounds = array<i64: 1, 8, 1>}]} {
    %c0_i32 = arith.constant 0 : i32
    %0 = arith.cmpi eq, %arg1, %c0_i32 : i32
    %1 = arith.extui %0 : i1 to i32
    %c0_i32_0 = arith.constant 0 : i32
    %2 = arith.cmpi ne, %1, %c0_i32_0 : i32
    scf.if %2 {
      %cst_17 = arith.constant 0xFF800000 : f32
      %27 = vector.broadcast %cst_17 : f32 to vector<8x1xf32>
      %c0_18 = arith.constant 0 : index
      %c0_19 = arith.constant 0 : index
      %28 = vector.load %arg5[%c0_18, %c0_19] : memref<8x1xf32, #tpu.memory_space<vmem>>, vector<8x1xf32>
      tpu.vector_store %arg5[%c0_18, %c0_19], %27 {strides = array<i32>} : memref<8x1xf32, #tpu.memory_space<vmem>>, vector<8x1xf32>,
      %cst_20 = arith.constant 0.000000e+00 : f32
      %29 = vector.broadcast %cst_20 : f32 to vector<8x1xf32>
      %c0_21 = arith.constant 0 : index
      %c0_22 = arith.constant 0 : index
      %30 = vector.load %arg6[%c0_21, %c0_22] : memref<8x1xf32, #tpu.memory_space<vmem>>, vector<8x1xf32>
      tpu.vector_store %arg6[%c0_21, %c0_22], %29 {strides = array<i32>} : memref<8x1xf32, #tpu.memory_space<vmem>>, vector<8x1xf32>,
    } else {
    }
    %c0 = arith.constant 0 : index
    %c0_1 = arith.constant 0 : index
    %3 = vector.load %arg2[%c0, %c0_1] : memref<8x32xbf16, #tpu.memory_space<vmem>>, vector<8x32xbf16>
    %c0_2 = arith.constant 0 : index
    %c0_3 = arith.constant 0 : index
    %4 = vector.load %arg3[%c0_2, %c0_3] : memref<32x128xbf16, #tpu.memory_space<vmem>>, vector<32x128xbf16>
    %cst = arith.constant dense<0.000000e+00> : vector<8x128xf32>
    %5 = tpu.matmul %3, %4, %cst {dimension_numbers = #tpu.dot_dimension_numbers<[1], [0], [0], [1], [0, 0, 1, 1], [], []>} : vector<8x32xbf16>, vector<32x128xbf16>, vector<8x128xf32> -> vector<8x128xf32>
    %cst_4 = arith.constant 14.2857141 : f32
    %6 = vector.broadcast %cst_4 : f32 to vector<8x128xf32>
    %7 = arith.mulf %5, %6 : vector<8x128xf32>
    %c0_5 = arith.constant 0 : index
    %c0_6 = arith.constant 0 : index
    %8 = vector.load %arg5[%c0_5, %c0_6] : memref<8x1xf32, #tpu.memory_space<vmem>>, vector<8x1xf32>
    %cst_7 = arith.constant dense<0xFF800000> : vector<8xf32>
    %9 = vector.multi_reduction <maximumf>, %7, %cst_7 [1] : vector<8x128xf32> to vector<8xf32>
    %10 = vector.shape_cast %9 : vector<8xf32> to vector<8x1xf32>
    %11 = arith.maximumf %8, %10 : vector<8x1xf32>
    %c0_8 = arith.constant 0 : index
    %c0_9 = arith.constant 0 : index
    %12 = vector.load %arg6[%c0_8, %c0_9] : memref<8x1xf32, #tpu.memory_space<vmem>>, vector<8x1xf32>
    %13 = arith.subf %8, %11 : vector<8x1xf32>
    %14 = math.exp %13 : vector<8x1xf32>
    %15 = arith.mulf %12, %14 : vector<8x1xf32>
    %16 = vector.broadcast %11 : vector<8x1xf32> to vector<8x128xf32>
    %17 = arith.subf %7, %16 : vector<8x128xf32>
    %18 = math.exp %17 : vector<8x128xf32>
    %cst_10 = arith.constant dense<0.000000e+00> : vector<8xf32>
    %19 = vector.multi_reduction <add>, %18, %cst_10 [1] : vector<8x128xf32> to vector<8xf32>
    %20 = vector.shape_cast %19 : vector<8xf32> to vector<8x1xf32>
    %21 = arith.addf %15, %20 : vector<8x1xf32>
    %c0_11 = arith.constant 0 : index
    %c0_12 = arith.constant 0 : index
    %22 = vector.load %arg6[%c0_11, %c0_12] : memref<8x1xf32, #tpu.memory_space<vmem>>, vector<8x1xf32>
    tpu.vector_store %arg6[%c0_11, %c0_12], %21 {strides = array<i32>} : memref<8x1xf32, #tpu.memory_space<vmem>>, vector<8x1xf32>,
    %c0_13 = arith.constant 0 : index
    %c0_14 = arith.constant 0 : index
    %23 = vector.load %arg5[%c0_13, %c0_14] : memref<8x1xf32, #tpu.memory_space<vmem>>, vector<8x1xf32>
    tpu.vector_store %arg5[%c0_13, %c0_14], %11 {strides = array<i32>} : memref<8x1xf32, #tpu.memory_space<vmem>>, vector<8x1xf32>,
    %c0_i32_15 = arith.constant 0 : i32
    %24 = arith.cmpi eq, %arg1, %c0_i32_15 : i32
    %25 = arith.extui %24 : i1 to i32
    %c0_i32_16 = arith.constant 0 : i32
    %26 = arith.cmpi ne, %25, %c0_i32_16 : i32
    scf.if %26 {
      %c0_17 = arith.constant 0 : index
      %c0_18 = arith.constant 0 : index
      %27 = vector.load %arg5[%c0_17, %c0_18] : memref<8x1xf32, #tpu.memory_space<vmem>>, vector<8x1xf32>
      %c0_19 = arith.constant 0 : index
      %c0_20 = arith.constant 0 : index
      %28 = vector.load %arg6[%c0_19, %c0_20] : memref<8x1xf32, #tpu.memory_space<vmem>>, vector<8x1xf32>
      %29 = math.log %28 : vector<8x1xf32>
      %30 = arith.addf %27, %29 : vector<8x1xf32>
      %c0_21 = arith.constant 0 : index
      %c0_22 = arith.constant 0 : index
      %c0_23 = arith.constant 0 : index
      %31 = vector.load %arg4[%c0_21, %c0_22, %c0_23] : memref<1x8x1xf32, #tpu.memory_space<vmem>>, vector<1x8x1xf32>
      %32 = vector.shape_cast %31 : vector<1x8x1xf32> to vector<8x1xf32>
      %33 = vector.shape_cast %30 : vector<8x1xf32> to vector<1x8x1xf32>
      tpu.vector_store %arg4[%c0_21, %c0_22, %c0_23], %33 {strides = array<i32>} : memref<1x8x1xf32, #tpu.memory_space<vmem>>, vector<1x8x1xf32>,
    } else {
    }
    return
  }
  func.func @transform_0(%arg0: i32, %arg1: i32) -> (i32, i32) {
    %c0_i32 = arith.constant 0 : i32
    %c0_i32_0 = arith.constant 0 : i32
    %c0_i32_1 = arith.constant 0 : i32
    return %c0_i32, %c0_i32_0 : i32, i32
  }
  func.func @transform_1(%arg0: i32, %arg1: i32) -> (i32, i32) {
    %c1_i32 = arith.constant 1 : i32
    %0 = arith.muli %arg0, %c1_i32 : i32
    %1 = arith.addi %0, %arg1 : i32
    %c0_i32 = arith.constant 0 : i32
    %c0_i32_0 = arith.constant 0 : i32
    return %c0_i32, %1 : i32, i32
  }
  func.func @transform_2(%arg0: i32, %arg1: i32) -> (i32, i32, i32) {
    %c0_i32 = arith.constant 0 : i32
    %c0_i32_0 = arith.constant 0 : i32
    %c0_i32_1 = arith.constant 0 : i32
    return %arg0, %c0_i32, %c0_i32_0 : i32, i32, i32
  }
}

</mosaic_0001>

<llo_original>
// kernel: tpu_custom_call.1
$region0: #{tpu_custom_call.1}
  #allocation0 [shape = 'u32[]', space=smem, size = 0x4, offset = 0x4, fixed_abs, tag = 'smem constant byte address 0x4 - core index']
  #allocation1 [shape = 'u32[144,128]{1,0:T(1,128)}', space=vmem, size = 0x12000, scoped, tag = 'internal scratch']
  #allocation2 [shape = 'f32[8,1]{1,0:T(8,128)}', space=vmem, size = 0x1000, scoped, tag = 'scratch operand']
  #allocation3 [shape = 'f32[8,1]{1,0:T(8,128)}', space=vmem, size = 0x1000, scoped, tag = 'scratch operand']
  %s0 = inlined_call_operand.hbm [shape: bf16[8,32], index: 0, kind: input, shape index: {}]
  %s1 = inlined_call_operand.hbm [shape: bf16[32,256], index: 1, kind: input, shape index: {}]
  %s2 = inlined_call_operand.vmem [shape: f32[2,8,1], index: 2, kind: output, shape index: {}]
  %s3 = sld [smem:[#allocation0]]
  $region57: #{tpu_custom_call.1} parent=0
    _
  %s5 = ssub.s32 1, %s3
  %s6 = scalar_select 0, %s5, %s3
  $region1: #{tpu_custom_call.1} parent=0
    #allocation4 [shape = 'u8[2048]{0}', space=vmem, size = 0x800, scoped, tag = 'input window, operand 0, single buffered']
    #allocation5 [shape = 's32[2]{0}', space=sflag, size = 0x8, scoped, tag = 'scoped memory for tpu_custom_call.1']
    #allocation6 [shape = 'u8[16384]{0}', space=vmem, size = 0x4000, scoped, tag = 'input window, operand 1']
    #allocation7 [shape = 's32[2]{0}', space=sflag, size = 0x8, scoped, tag = 'scoped memory for tpu_custom_call.1']
    %7 = vsyncpa [#allocation5], 0
    %8 = vsyncpa [#allocation7], 0
    %s9 = scalar_lea.sflag [#allocation7], 1
    %10 = vsyncpa %s9, 0
    loop: start=0, step=1, limit=4
    $region2: #{tpu_custom_call.1} parent=1 // loop_pre_header
      _
    $region3: #{tpu_custom_call.1} parent=1 // loop_header
      %s12 = sphi 0, %s16
      %p13 = scmp.ge.s32.totalorder %s12, 4
      %s19 = sphi 0, %s31
      %s20 = sphi 0, %s27
      %s21 = sphi 0, %s19
      %s22 = sphi 0, %s20
      %s23 = sphi 0, %s21
      %s24 = sphi 0, %s22
      %s32 = sphi 0, %s32
      %s34 = sphi 0, %s32
      %s35 = sphi 0, %s34
      %s49 = sphi 0, %s35
      %s57 = sphi 0, %s59
      %s60 = sphi 0, %s57
      %s61 = sphi 0, %s60
      %s77 = sphi 0, %s61
      %s83 = sphi 0, %s85
      %s86 = sphi 0, %s83
      %s87 = sphi 0, %s86
      %s103 = sphi 0, %s87
    $region4: #{tpu_custom_call.1} parent=1 // loop_header_branch
      %15 = sbr.rel (%p13) target = $region8
    $region5: #{tpu_custom_call.1} parent=1 // loop_body
      %s17 = ssub.s32 %s12, 1
      %s18 = ssub.s32 %s12, 2
      %s25 = sadd.s32 1, %s20
      %p26 = scmp.ge.s32.totalorder %s25, 1
      %s27 = scalar_select %p26, 0, %s25
      %s28 = sadd.s32 1, %s19
      %s29 = scalar_select %p26, %s28, %s19
      %p30 = scmp.ge.s32.totalorder %s29, 2
      %s31 = scalar_select %p30, 0, %s29
      %s33 = sadd.s32 %s32, 1
      %p36 = scmp.eq.s32.totalorder %s12, 1
      %p37 = scmp.ne.s32.totalorder %s32, %s34
      %p38 = scmp.eq.s32.totalorder %s12, 0
      %p39 = por %p37, %p38
      %p40 = scmp.ne.s32.totalorder %s32, %s34
      %p41 = scmp.eq.s32.totalorder %s17, 1
      %p42 = por %p40, %p41
      %p43 = scmp.ne.s32.totalorder %s34, %s35
      %p44 = scmp.eq.s32.totalorder %s17, 0
      %p45 = por %p43, %p44
      %p46 = scmp.ne.s32.totalorder %s34, %s35
      %p47 = scmp.eq.s32.totalorder %s18, 1
      %p48 = por %p46, %p47
      %p50 = scmp.ne.s32.totalorder %s35, %s49
      %p51 = scmp.eq.s32.totalorder %s18, 0
      %p52 = por %p50, %p51
      %s53 = sadd.s32 %s19, %s20
      %s54 = sadd.s32 %s31, %s27
      %s55 = ssub.s32 %s53, %s54
      %p56 = scmp.eq.s32.totalorder %s55, 0
      %s58 = sadd.s32 %s57, 1
      %s59 = scalar_select %p56, %s57, %s58
      %p62 = pneg %p56
      %p63 = scmp.eq.s32.totalorder %s12, 1
      %p64 = por %p62, %p63
      %p65 = scmp.ne.s32.totalorder %s57, %s60
      %p66 = scmp.eq.s32.totalorder %s12, 0
      %p67 = por %p65, %p66
      %p68 = scmp.ne.s32.totalorder %s57, %s60
      %p69 = scmp.eq.s32.totalorder %s17, 1
      %p70 = por %p68, %p69
      %p71 = scmp.ne.s32.totalorder %s60, %s61
      %p72 = scmp.eq.s32.totalorder %s17, 0
      %p73 = por %p71, %p72
      %p74 = scmp.ne.s32.totalorder %s60, %s61
      %p75 = scmp.eq.s32.totalorder %s18, 1
      %p76 = por %p74, %p75
      %p78 = scmp.ne.s32.totalorder %s61, %s77
      %p79 = scmp.eq.s32.totalorder %s18, 0
      %p80 = por %p78, %p79
      %s81 = ssub.s32 %s19, %s31
      %p82 = scmp.eq.s32.totalorder %s81, 0
      %s84 = sadd.s32 %s83, 1
      %s85 = scalar_select %p82, %s83, %s84
      %p88 = pneg %p82
      %p89 = scmp.eq.s32.totalorder %s12, 1
      %p90 = por %p88, %p89
      %p91 = scmp.ne.s32.totalorder %s83, %s86
      %p92 = scmp.eq.s32.totalorder %s12, 0
      %p93 = por %p91, %p92
      %p94 = scmp.ne.s32.totalorder %s83, %s86
      %p95 = scmp.eq.s32.totalorder %s17, 1
      %p96 = por %p94, %p95
      %p97 = scmp.ne.s32.totalorder %s86, %s87
      %p98 = scmp.eq.s32.totalorder %s17, 0
      %p99 = por %p97, %p98
      %p100 = scmp.ne.s32.totalorder %s86, %s87
      %p101 = scmp.eq.s32.totalorder %s18, 1
      %p102 = por %p100, %p101
      %p104 = scmp.ne.s32.totalorder %s87, %s103
      %p105 = scmp.eq.s32.totalorder %s18, 0
      %p106 = por %p104, %p105
      %p107 = scmp.le.s32.totalorder 1, %s12
      %p108 = scmp.lt.s32.totalorder %s12, 3
      %p109 = pnand %p107, %p108
      %p110 = pneg %p109
      // Predicated region
      $region9: #{tpu_custom_call.1} parent=5 // pred_check
        _
      $region10: #{tpu_custom_call.1} parent=5 // pred_check_branch
        %112 = sbr.rel (%p109) target = $region12
      $region11: #{tpu_custom_call.1} parent=5 // pred_region
        %s113 = ssub.s32 %s12, 1
        // Predicated region
        $region13: #{tpu_custom_call.1} parent=11 // pred_check
          %p114 = pneg %p45
        $region14: #{tpu_custom_call.1} parent=11 // pred_check_branch
          %116 = sbr.rel (%p114) target = $region16
        $region15: #{tpu_custom_call.1} parent=11 // pred_region
          %s118 = ssub.s32 64, 64
          %119 = vsyncadd [#allocation5], %s118
          %s121 = sshll.u32 [#allocation4], 4
          %s122 = int_to_ptr.vmem [resolvable:$true] %s121
          %124 = dma.hbm_to_vmem [thread:$0]  %s0, 64, %s122, [#allocation5]
        $region16: #{tpu_custom_call.1} parent=11 // pred_fallthru
          _
      $region12: #{tpu_custom_call.1} parent=5 // pred_fallthru
        _
      %p125 = scmp.lt.s32.totalorder %s12, 2
      // Predicated region
      $region17: #{tpu_custom_call.1} parent=5 // pred_check
        %p126 = pneg %p125
      $region18: #{tpu_custom_call.1} parent=5 // pred_check_branch
        %128 = sbr.rel (%p126) target = $region20
      $region19: #{tpu_custom_call.1} parent=5 // pred_region
        // Predicated region
        $region21: #{tpu_custom_call.1} parent=19 // pred_check
          %p129 = pneg %p67
        $region22: #{tpu_custom_call.1} parent=19 // pred_check_branch
          %131 = sbr.rel (%p129) target = $region24
        $region23: #{tpu_custom_call.1} parent=19 // pred_region
          %s132 = sand.u32 %s57, 1
          %s133 = scalar_lea.sflag [#allocation7], %s132
          %s134 = sand.u32 %s57, 1
          %s135 = smul.addr %s134, 16
          %s136 = scalar_lea.vmem [#allocation6], %s135
          %s137 = sadd.s32 %s19, %s20
          %s139 = ssub.s32 256, 256
          %140 = vsyncadd %s133, %s139
          %s141 = smul.addr %s137, 64
          %s142 = scalar_lea.hbm %s1, %s141
          %s143 = sshll.u32 %s136, 4
          %s144 = int_to_ptr.vmem [resolvable:$true] %s143
          %149 = dma.hbm_to_vmem [thread:$0]  %s142, 256, %s144, %s133, 128, 64, 4
        $region24: #{tpu_custom_call.1} parent=19 // pred_fallthru
          _
      $region20: #{tpu_custom_call.1} parent=5 // pred_fallthru
        _
      %p150 = scmp.le.s32.totalorder 1, %s12
      %p151 = scmp.lt.s32.totalorder %s12, 3
      %p152 = pnand %p150, %p151
      %p153 = pneg %p152
      // Predicated region
      $region25: #{tpu_custom_call.1} parent=5 // pred_check
        _
      $region26: #{tpu_custom_call.1} parent=5 // pred_check_branch
        %155 = sbr.rel (%p152) target = $region28
      $region27: #{tpu_custom_call.1} parent=5 // pred_region
        %s156 = ssub.s32 %s12, 1
        // Predicated region
        $region29: #{tpu_custom_call.1} parent=27 // pred_check
          %p157 = pneg %p45
        $region30: #{tpu_custom_call.1} parent=27 // pred_check_branch
          %159 = sbr.rel (%p157) target = $region32
        $region31: #{tpu_custom_call.1} parent=27 // pred_region
          %160 = dma.done [#allocation5], 64
        $region32: #{tpu_custom_call.1} parent=27 // pred_fallthru
          _
        %s161 = sand.u32 %s60, 1
        %s162 = scalar_lea.sflag [#allocation7], %s161
        %s163 = sand.u32 %s60, 1
        %s164 = smul.addr %s163, 16
        %s165 = scalar_lea.vmem [#allocation6], %s164
        // Predicated region
        $region33: #{tpu_custom_call.1} parent=27 // pred_check
          %p166 = pneg %p73
        $region34: #{tpu_custom_call.1} parent=27 // pred_check_branch
          %168 = sbr.rel (%p166) target = $region36
        $region35: #{tpu_custom_call.1} parent=27 // pred_region
          %169 = dma.done %s162, 256
        $region36: #{tpu_custom_call.1} parent=27 // pred_fallthru
          _
        %p170 = pneg %p45
        %p171 = pneg %p42
        %s172 = sand.u32 %s60, 1
        %s173 = scalar_lea.sflag [#allocation7], %s172
        %s174 = sand.u32 %s60, 1
        %s175 = smul.addr %s174, 16
        %s176 = scalar_lea.vmem [#allocation6], %s175
        %p177 = pneg %p73
        %p178 = pneg %p70
        %p179 = pneg %p99
        %p180 = pneg %p96
        %p181 = scmp.lt.s32.totalorder %s21, 1
        %s182 = scalar_select %p181, %s21, 1
        %s183 = smul.addr %s182, 8
        %s184 = scalar_lea.vmem %s2, %s183
        %s185 = sadd.s32 %s21, %s22
        %p186 = scmp.lt.s32.totalorder %s21, 1
        %s187 = scalar_select %p186, %s21, 1
        %s188 = smul.addr %s187, 8
        %s189 = scalar_lea.vmem %s2, %s188
        %p191 = scmp.eq.s32.totalorder %s22, 0
        // Predicated region
        $region37: #{tpu_custom_call.1} parent=27 // pred_check
          %p192 = pneg %p191
        $region38: #{tpu_custom_call.1} parent=27 // pred_check_branch
          %194 = sbr.rel (%p192) target = $region40
        $region39: #{tpu_custom_call.1} parent=27 // pred_region
          %vm195 = vcmask 7168
          %196 = vst.msk [vmem:[#allocation2] sm:$0xff] %vm195, -inf
          %197 = vst.msk [vmem:[#allocation3] sm:$0xff] %vm195, 0.0
        $region40: #{tpu_custom_call.1} parent=27 // pred_fallthru
          _
        %v198 = vld [vmem:[#allocation4] sm:$0xf]
        %v199 = vld [vmem:[%s165] sm:$0xf]
        %v200 = vld [vmem:[%s165 + $0x4] sm:$0xf]
        %v201 = vld [vmem:[%s165 + $0x8] sm:$0xf]
        %v202 = vld [vmem:[%s165 + $0xc] sm:$0xf]
        %v207 = vunpack.c.l.b16 %v199
        %v208 = vunpack.c.l.b16 %v200
        %v209 = vunpack.c.l.b16 %v201
        %v210 = vunpack.c.l.b16 %v202
        %v211 = vpack.c.b16 %v208, %v207
        %v212 = vpack.c.b16 %v210, %v209
        %vm215 = vcmask 261120
        %v217 = vsel %vm215, %v198, 0
        %219 = vmatprep.subr.bf16.mxu0 0
        %220 = vmatpush1.bf16.msra.mxu0 0
        %221 = vmatprep.subr.bf16.mxu0 0
        %222 = vmatpush1.bf16.msra.mxu0 0
        %223 = vmatprep.subr.bf16.mxu0 0
        %224 = vmatpush1.bf16.msra.mxu0 0
        %225 = vmatprep.subr.bf16.mxu0 0
        %226 = vmatpush1.bf16.msra.mxu0 0
        %227 = vmatprep.subr.bf16.mxu0 0
        %228 = vmatpush1.bf16.msra.mxu0 0
        %229 = vmatprep.subr.bf16.mxu0 0
        %230 = vmatpush1.bf16.msra.mxu0 0
        %231 = vmatprep.subr.bf16.mxu0 0
        %232 = vmatpush1.bf16.msra.mxu0 %v212
        %233 = vmatprep.subr.bf16.mxu0 0
        %234 = vmatpush1.bf16.msra.mxu0 %v211
        %235 = vmatprep.subr.bf16.mxu0 0
        %236 = vmatpush2.bf16.msra.mxu0 0
        %237 = vmatprep.subr.bf16.mxu0 0
        %238 = vmatpush2.bf16.msra.mxu0 0
        %239 = vmatprep.subr.bf16.mxu0 0
        %240 = vmatpush2.bf16.msra.mxu0 0
        %241 = vmatprep.subr.bf16.mxu0 0
        %242 = vmatpush2.bf16.msra.mxu0 0
        %243 = vmatprep.subr.bf16.mxu0 0
        %244 = vmatpush2.bf16.msra.mxu0 0
        %245 = vmatprep.subr.bf16.mxu0 0
        %246 = vmatpush2.bf16.msra.mxu0 0
        %247 = vmatprep.subr.bf16.mxu0 0
        %248 = vmatpush2.bf16.msra.mxu0 0
        %249 = vmatprep.subr.bf16.mxu0 0
        %250 = vmatpush2.bf16.msra.mxu0 0
        %251 = vmatprep.mubr.bf16.mxu0 0
        %252 = vmatmul.mubr.bf16.gmra.mxu0 %v217
        %v253 = vpop.f32.mrf.mxu0
        %v254 = vadd.f32 0.0, %v253
        %v255 = vpop.f32.mrf.mxu0
        %v256 = vpop.f32.mrf.mxu0
        %v257 = vpop.f32.mrf.mxu0
        %258 = vdwg.mxu0
        %v259 = vmul.f32 %v254, 14.285714
        %v260 = vld [vmem:[#allocation2] sm:$0xff]
        %261 = vmax.xlane.f32.xlu0 %v259
        %v262 = vpop.xlane.xlu0 %261
        %v263 = vmax.f32 %v260, %v262
        %v264 = vld [vmem:[#allocation3] sm:$0xff]
        %v265 = vsub.f32 %v260, %v263
        %v266 = vmul.f32 %v265, 1.442695
        %v267 = vpow.pop %v266
        %v268 = vmul.f32 %v264, %v267
        %270 = vset.pattern.permute.xlu0 0
        %271 = vperm.xlu0 %270, %v263
        %v272 = vpop.permute.xlu0 %271
        %v274 = vsub.f32 %v259, %v272
        %v275 = vmul.f32 %v274, 1.442695
        %v276 = vpow.pop %v275
        %277 = vadd.xlane.f32.xlu0 %v276
        %v278 = vpop.xlane.xlu0 %277
        %v279 = vadd.f32 %v268, %v278
        %vm280 = vcmask 7168
        %281 = vst.msk [vmem:[#allocation3] sm:$0xff] %vm280, %v279
        %282 = vst.msk [vmem:[#allocation2] sm:$0xff] %vm280, %v263
        // Predicated region
        $region41: #{tpu_custom_call.1} parent=27 // pred_check
          %p283 = pneg %p191
        $region42: #{tpu_custom_call.1} parent=27 // pred_check_branch
          %285 = sbr.rel (%p283) target = $region44
        $region43: #{tpu_custom_call.1} parent=27 // pred_region
          %v286 = vld [vmem:[#allocation2] sm:$0xff]
          %v287 = vld [vmem:[#allocation3] sm:$0xff]
          %v288 = vlog2.pop %v287
          %v289 = vmul.f32 %v288, 0.6931472
          %v290 = vadd.f32 %v286, %v289
          %291 = vst.msk [vmem:[%s189] sm:$0xff] %vm280, %v290
        $region44: #{tpu_custom_call.1} parent=27 // pred_fallthru
          _
        %p292 = scmp.lt.s32.totalorder %s21, 1
        %s293 = scalar_select %p292, %s21, 1
        %s294 = smul.addr %s293, 8
        %s295 = scalar_lea.vmem %s2, %s294
        // Predicated region
        $region45: #{tpu_custom_call.1} parent=27 // pred_check
          %p296 = pneg %p96
        $region46: #{tpu_custom_call.1} parent=27 // pred_check_branch
          %298 = sbr.rel (%p296) target = $region48
        $region47: #{tpu_custom_call.1} parent=27 // pred_region
          _
        $region48: #{tpu_custom_call.1} parent=27 // pred_fallthru
          _
      $region28: #{tpu_custom_call.1} parent=5 // pred_fallthru
        _
      %p299 = scmp.le.s32.totalorder 2, %s12
      // Predicated region
      $region49: #{tpu_custom_call.1} parent=5 // pred_check
        %p300 = pneg %p299
      $region50: #{tpu_custom_call.1} parent=5 // pred_check_branch
        %302 = sbr.rel (%p300) target = $region52
      $region51: #{tpu_custom_call.1} parent=5 // pred_region
        %s303 = ssub.s32 %s12, 2
        // Predicated region
        $region53: #{tpu_custom_call.1} parent=51 // pred_check
          %p304 = pneg %p102
        $region54: #{tpu_custom_call.1} parent=51 // pred_check_branch
          %306 = sbr.rel (%p304) target = $region56
        $region55: #{tpu_custom_call.1} parent=51 // pred_region
          %p307 = scmp.lt.s32.totalorder %s23, 1
          %s308 = scalar_select %p307, %s23, 1
          %s309 = smul.addr %s308, 8
          %s310 = scalar_lea.vmem %s2, %s309
        $region56: #{tpu_custom_call.1} parent=51 // pred_fallthru
          _
      $region52: #{tpu_custom_call.1} parent=5 // pred_fallthru
        _
    $region6: #{tpu_custom_call.1} parent=1 // loop_footer
      %s16 = sadd.s32 1, %s12
    $region7: #{tpu_custom_call.1} parent=1 // loop_footer_branch
      %11 = sbr.rel target = $region3
    $region8: #{tpu_custom_call.1} parent=1 // loop_exit
      _
    %311 = vsyncpa [#allocation5], 1
    %s312 = scalar_lea.sflag [#allocation5], 1
    %313 = vsyncpa %s312, 1
    %314 = vsyncpa [#allocation7], 1
    %s315 = scalar_lea.sflag [#allocation7], 1
    %316 = vsyncpa %s315, 1

</llo_original>
